<compile_context>
chip_gen: v5e
topology: v5e:2x2
jax: 0.10.0
libtpu: 0.0.40
codegen_flags: <defaults>
</compile_context>

<pallas_src>
import math
import random
from functools import partial

import numpy as np
import jax
import jax.numpy as jnp
from jax.experimental import pallas as pl
from jax.experimental.pallas import tpu as pltpu


# ----------------------- host-side rotation geometry (static) -----------------------

def _rotate_row_params(n, degree):
    """Nearest-neighbour rotation of a 1 x n image by `degree` about its centre
    (zero fill, output size unchanged). Returns, for every output column, the source
    column index and a validity mask (invalid -> filled with zero)."""
    # TODO(synk): the CW/CCW sign convention may be mirrored vs torchvision TF.rotate for
    # asymmetric angles; the degenerate 1-row geometry is symmetric for the default 90.
    theta = math.radians(float(degree))
    cos_t, sin_t = math.cos(theta), math.sin(theta)
    j = np.arange(n, dtype=np.float64)
    cx = (n - 1) / 2.0                      # centre of the single row; row centre y = 0
    x_o = j - cx                            # centred output x coordinates (pixel centres)
    src_col = np.rint(cos_t * x_o + cx)     # inverse-rotate the output grid into the source
    src_row = np.rint(sin_t * x_o)          # the source image only has row 0
    valid = (src_row == 0) & (src_col >= 0) & (src_col < n)
    src_idx = np.clip(src_col, 0, n - 1).astype(np.int64)
    return src_idx, valid


# --------------------------------- Pallas kernel ------------------------------------

def _rotate_rows_kernel(x_src_ref, o_ref, *, copy_ops):
    # Zero-fill the whole (block_B, N) tile: lane-dense stores across the full row.
    o_ref[...] = jnp.zeros_like(o_ref)
    # Statically-compiled copies covering the (usually tiny) valid window.
    #   slice op : out[:, dst:dst+L] = x_src[:, src:src+L]
    #   bcast op : out[:, dst:dst+L] = x_src[:, src]   (same source column repeated)
    for dst, src, length, is_bcast in copy_ops:
        if is_bcast:
            col = x_src_ref[:, src:src + 1]
            o_ref[:, dst:dst + length] = jnp.broadcast_to(col, (col.shape[0], length))
        else:
            o_ref[:, dst:dst + length] = x_src_ref[:, src:src + length]


def rotate_images(x, degree):
    """x: (B, seq_len, h_dim). Rotates every flattened sample as a 1 x (S*H) image."""
    B, S, H = x.shape
    N = S * H
    src_idx, valid = _rotate_row_params(N, degree)
    x_flat = x.reshape(B, N)

    nz = np.nonzero(valid)[0]
    if nz.size == 0:                         # rotation maps nothing into the canvas
        return jnp.zeros_like(x)
    if nz.size == N and np.array_equal(src_idx, np.arange(N)):
        return x                             # identity rotation (degree ≡ 0 mod 360)

    lo, hi = int(nz[0]), int(nz[-1]) + 1     # valid region is contiguous for this geometry
    w_out = hi - lo
    src_win = src_idx[lo:hi]
    valid_win = valid[lo:hi]
    s_lo = int(src_win[valid_win].min())
    s_hi = int(src_win[valid_win].max()) + 1
    v_src = s_hi - s_lo

    # Compress (dst, src) pairs into maximal +1-step slice runs / constant-source
    # broadcast runs so the kernel is a handful of static copies.
    # TODO(synk): degree ≡ 180 (mod 360) degenerates to per-column copies (a lane
    # reversal); for very large seq_len*h_dim a dedicated reversal path would be needed.
    pairs = [(lo + k, int(src_win[k]) - s_lo) for k in range(w_out) if valid_win[k]]
    ops = []
    t = 0
    while t < len(pairs):
        d0, s0 = pairs[t]
        u = t + 1
        while (u < len(pairs) and pairs[u][0] == pairs[u - 1][0] + 1
               and pairs[u][1] == pairs[u - 1][1] + 1):
            u += 1
        if u - t >= 2:                       # contiguous source run -> one sliced copy
            ops.append((d0, s0, u - t, False))
            t = u
            continue
        u = t + 1
        while (u < len(pairs) and pairs[u][0] == pairs[u - 1][0] + 1
               and pairs[u][1] == s0):
            u += 1
        ops.append((d0, s0, u - t, (u - t) >= 2))   # constant source -> broadcast
        t = u
    copy_ops = tuple(ops)

    # Only the needed source columns are streamed from HBM.
    x_src = x_flat[:, s_lo:s_hi]

    block_b = B if B <= 8 else 8             # batch rows on sublanes, N on lanes
    grid = (pl.cdiv(B, block_b),)

    itemsize = jnp.dtype(x.dtype).itemsize
    est_vmem = 2 * itemsize * block_b * (N + v_src) + (4 << 20)   # double-buffered blocks
    compiler_params = pltpu.CompilerParams(
        dimension_semantics=("parallel",),   # batch blocks are independent (megacore)
        vmem_limit_bytes=int(min(max(est_vmem, 32 << 20), 64 << 20)),
    )
    # TODO(synk): for extremely large seq_len*h_dim add an inner grid axis chunking N.

    grid_spec = pltpu.PrefetchScalarGridSpec(
        num_scalar_prefetch=0,
        grid=grid,
        in_specs=[
            pl.BlockSpec((block_b, v_src), lambda i: (i, 0)),    # tiny source window
        ],
        out_specs=pl.BlockSpec((block_b, N), lambda i: (i, 0)),  # lane-dense output tile
    )
    out = pl.pallas_call(
        partial(_rotate_rows_kernel, copy_ops=copy_ops),
        out_shape=jax.ShapeDtypeStruct((B, N), x.dtype),
        grid_spec=grid_spec,
        compiler_params=compiler_params,
    )(x_src)
    return out.reshape(B, S, H)


# ------------------------------- forward wrapper ------------------------------------

def rotate_augmentation_forward(x, y, *, p=0.3, degree=90, prob_label=False, rng=None):
    """Equivalent of RotateAugmentation.forward(x, y). The apply/skip decision is
    host-side Python RNG (like `random.random() <= self.prob`) so there is no
    device->host sync; labels pass through untouched (prob_label kept for parity)."""
    del prob_label  # unused by the reference forward
    r = rng.random() if rng is not None else random.random()
    if r > p:
        return x, y
    return rotate_images(x, degree), y


# -------------------------------------- demo ----------------------------------------

if __name__ == "__main__":
    key = jax.random.PRNGKey(0)
    k_x, k_y = jax.random.split(key)

    B, S, Hd = 2, 8, 32                      # (batch, seq_len, h_dim)
    x = jax.random.normal(k_x, (B, S, Hd), dtype=jnp.float32)
    y = jax.random.randint(k_y, (B,), 0, 10, dtype=jnp.int32)

    # p=1.0 so the rotation kernel is guaranteed to execute.
    x_aug, y_aug = rotate_augmentation_forward(x, y, p=1.0, degree=90,
                                               rng=random.Random(0))
    x_aug = jax.block_until_ready(x_aug)

    # Pure-numpy reference of the same rotation semantics.
    def rotate_reference(x_np, degree):
        b, s, h = x_np.shape
        n = s * h
        src_idx, valid = _rotate_row_params(n, degree)
        flat = x_np.reshape(b, n)
        out = np.where(valid[None, :], flat[:, src_idx], 0.0).astype(x_np.dtype)
        return out.reshape(b, s, h)

    x_np = np.asarray(x)
    assert x_aug.shape == x.shape and x_aug.dtype == x.dtype
    assert jnp.array_equal(y_aug, y)                      # labels untouched
    np.testing.assert_array_equal(np.asarray(x_aug), rotate_reference(x_np, 90))
    # 90-degree rotation of a 1-row strip keeps at most the centre pixel pair per sample.
    assert int(np.count_nonzero(np.asarray(x_aug))) <= 2 * B

    # A second angle exercises a wider valid window (contiguous slice-copy path).
    x_aug5 = jax.block_until_ready(rotate_images(x, 5))
    np.testing.assert_array_equal(np.asarray(x_aug5), rotate_reference(x_np, 5))

    # Larger batch exercises the multi-block "parallel" grid (2 batch blocks of 8).
    xb = jax.random.normal(k_x, (16, S, Hd), dtype=jnp.float32)
    xb_aug = jax.block_until_ready(rotate_images(xb, 90))
    np.testing.assert_array_equal(np.asarray(xb_aug),
                                  rotate_reference(np.asarray(xb), 90))

    # p=0 path: identity pass-through, no kernel launched.
    x_same, y_same = rotate_augmentation_forward(x, y, p=0.0, degree=90,
                                                 rng=random.Random(0))
    assert x_same is x and y_same is y

    print("KERNEL_OK")
</pallas_src>

<mosaic_0001>
module attributes {stable_mosaic.version = 11 : i64} {
  func.func @_rotate_rows_kernel(%arg0: i32, %arg1: memref<2x1xf32, #tpu.memory_space<vmem>>, %arg2: memref<2x256xf32, #tpu.memory_space<vmem>>) attributes {dimension_semantics = [#tpu.dimension_semantics<parallel>], iteration_bounds = array<i64: 1>, scalar_prefetch = 0 : i64, scratch_operands = 0 : i64, tpu.core_type = #tpu.core_type<tc>, window_params = [{transform_indices = @transform_0, window_bounds = array<i64: 2, 1>}, {transform_indices = @transform_1, window_bounds = array<i64: 2, 256>}]} {
    %cst = arith.constant 0.000000e+00 : f32
    %0 = vector.broadcast %cst : f32 to vector<2x256xf32>
    %c0 = arith.constant 0 : index
    %c0_0 = arith.constant 0 : index
    %1 = vector.load %arg2[%c0, %c0_0] : memref<2x256xf32, #tpu.memory_space<vmem>>, vector<2x256xf32>
    tpu.vector_store %arg2[%c0, %c0_0], %0 {strides = array<i32>} : memref<2x256xf32, #tpu.memory_space<vmem>>, vector<2x256xf32>,
    %c0_1 = arith.constant 0 : index
    %c0_2 = arith.constant 0 : index
    %2 = vector.load %arg1[%c0_1, %c0_2] : memref<2x1xf32, #tpu.memory_space<vmem>>, vector<2x1xf32>
    %3 = vector.shape_cast %2 : vector<2x1xf32> to vector<2x1xf32>
    %4 = vector.broadcast %3 : vector<2x1xf32> to vector<2x2xf32>
    %c0_3 = arith.constant 0 : index
    %c127 = arith.constant 127 : index
    %5 = vector.load %arg2[%c0_3, %c127] : memref<2x256xf32, #tpu.memory_space<vmem>>, vector<2x2xf32>
    tpu.vector_store %arg2[%c0_3, %c127], %4 {strides = array<i32>} : memref<2x256xf32, #tpu.memory_space<vmem>>, vector<2x2xf32>,
    return
  }
  func.func @transform_0(%arg0: i32) -> (i32, i32) {
    %c0_i32 = arith.constant 0 : i32
    %c0_i32_0 = arith.constant 0 : i32
    return %arg0, %c0_i32 : i32, i32
  }
  func.func @transform_1(%arg0: i32) -> (i32, i32) {
    %c0_i32 = arith.constant 0 : i32
    %c0_i32_0 = arith.constant 0 : i32
    return %arg0, %c0_i32 : i32, i32
  }
}

</mosaic_0001>

<llo_original>
// kernel: tpu_custom_call.1
$region0: #{tpu_custom_call.1}
  #allocation0 [shape = 'u32[]', space=smem, size = 0x4, offset = 0x4, fixed_abs, tag = 'smem constant byte address 0x4 - core index']
  #allocation1 [shape = 'u32[72,128]{1,0:T(1,128)}', space=vmem, size = 0x9000, scoped, tag = 'internal scratch']
  %s0 = inlined_call_operand.vmem [shape: f32[2,1], index: 0, kind: input, shape index: {}]
  %s1 = inlined_call_operand.hbm [shape: f32[2,256], index: 1, kind: output, shape index: {}]
  %s2 = sld [smem:[#allocation0]]
  $region14: #{tpu_custom_call.1} parent=0
    _
  %s4 = ssub.s32 1, %s2
  %s5 = scalar_select 0, %s4, %s2
  $region1: #{tpu_custom_call.1} parent=0
    #allocation2 [shape = 'u8[2048]{0}', space=vmem, size = 0x800, scoped, tag = 'output window, operand 0, single buffered']
    #allocation3 [shape = 's32[1]{0}', space=sflag, size = 0x4, scoped, tag = 'scoped memory for tpu_custom_call.1']
    %6 = vsyncpa [#allocation3], 0
    // Predicated region
    $region2: #{tpu_custom_call.1} parent=1 // pred_check
      _
    $region3: #{tpu_custom_call.1} parent=1 // pred_check_branch
      %8 = sbr.rel (0) target = $region5
    $region4: #{tpu_custom_call.1} parent=1 // pred_region
      _
    $region5: #{tpu_custom_call.1} parent=1 // pred_fallthru
      _
    %9 = vst [vmem:[#allocation2] sm:$0xf] 0.0
    %v10 = vld [vmem:[%s0] sm:$0x3]
    %12 = vset.pattern.permute.xlu0 0
    %13 = vperm.xlu0 %12, %v10
    %v14 = vpop.permute.xlu0 %13
    %vm16 = vcmask 1042424
    %vm17 = vcmask 3074
    %vm18 = vmor %vm17, %vm16
    %19 = vst.msk [vmem:[#allocation2] sm:$0xf] %vm18, %v14
    // Predicated region
    $region6: #{tpu_custom_call.1} parent=1 // pred_check
      _
    $region7: #{tpu_custom_call.1} parent=1 // pred_check_branch
      %21 = sbr.rel (0) target = $region9
    $region8: #{tpu_custom_call.1} parent=1 // pred_region
      %23 = vsyncadd [#allocation3], 0
      %s25 = sshll.u32 [#allocation2], 4
      %s26 = int_to_ptr.vmem [resolvable:$true] %s25
      %s27 = sshll.u32 %s1, 4
      %s28 = int_to_ptr.hbm [resolvable:$true] %s27
      %30 = dma.vmem_to_hbm [thread:$0]  %s26, 64, %s28, [#allocation3]
    $region9: #{tpu_custom_call.1} parent=1 // pred_fallthru
      _
    // Predicated region
    $region10: #{tpu_custom_call.1} parent=1 // pred_check
      _
    $region11: #{tpu_custom_call.1} parent=1 // pred_check_branch
      %32 = sbr.rel (0) target = $region13
    $region12: #{tpu_custom_call.1} parent=1 // pred_region
      %34 = dma.done [#allocation3], 64
    $region13: #{tpu_custom_call.1} parent=1 // pred_fallthru
      _
    %35 = vsyncpa [#allocation3], 1

</llo_original>
